<compile_context>
chip_gen: v5e
topology: v5e:2x2
jax: 0.10.0
libtpu: 0.0.40
codegen_flags: <defaults>
</compile_context>

<pallas_src>
import functools

import jax
import jax.numpy as jnp
from jax.experimental import pallas as pl
from jax.experimental.pallas import tpu as pltpu


def _mae_loss_kernel(pred_ref, labels_ref, out_ref, *, n_valid, tile_n,
                     tiles_per_core):
    """One grid step: add  (#valid - sum_i softmax(pred)_i[label_i])  for a tile.

    pred_ref   : (C, TILE_N) logits, native dtype, samples lane-dense.
    labels_ref : (1, TILE_N) int32 class ids, lane-dense.
    out_ref    : (8, 128) float32 per-core partial sum (resident accumulator).
    """
    core = pl.program_id(0)
    step = pl.program_id(1)

    @pl.when(step == 0)
    def _init():
        out_ref[...] = jnp.zeros_like(out_ref)

    # Unclamped logical tile index.  The index_map clamps the DMA so it never
    # reads out of bounds; duplicated / fully-out-of-range tiles contribute
    # exactly zero through the masks below.
    tile_idx = core * tiles_per_core + step
    start = tile_idx * tile_n

    x = pred_ref[...].astype(jnp.float32)                 # (C, T) f32 in VMEM
    labels = labels_ref[...]                              # (1, T) int32
    c, t = x.shape

    col = jax.lax.broadcasted_iota(jnp.int32, (1, t), 1) + start
    valid = col < n_valid                                 # (1, T) bool

    # Numerically stable softmax over the class (sublane) axis.
    m = jnp.max(x, axis=0, keepdims=True)                 # (1, T)
    e = jnp.exp(x - m)                                    # (C, T)   1 EUP op/elem
    sumexp = jnp.where(valid, jnp.sum(e, axis=0, keepdims=True), 1.0)

    # One-hot gather of the target class; invalid columns get label -1 so no
    # class matches (folds the validity mask into the single int compare).
    labels_m = jnp.where(valid, labels, -1)               # (1, T)
    class_ids = jax.lax.broadcasted_iota(jnp.int32, (c, t), 0)
    e_tgt = jnp.sum(jnp.where(class_ids == labels_m, e, 0.0),
                    axis=0, keepdims=True)                # (1, T)

    # p_target = e_tgt / sumexp  (EUP approx reciprocal: free slot).
    p_tgt = e_tgt * pl.reciprocal(sumexp, approx=True)    # zero on invalid cols

    # sum_i (1 - p_i)  ==  (#valid in this tile)  -  sum_i p_i
    count = jnp.clip(n_valid - start, 0, t).astype(jnp.float32)
    out_ref[...] += count - jnp.sum(p_tgt)


def mae_loss(pred, labels, *, scale=2.0, tile_n=131072, num_cores=2,
             class_major=False):
    """scale * mean(1 - softmax(pred, class_axis)[labels]).

    pred   : (N, C) logits (module-native), or (C, N) if class_major=True.
    labels : (N,) integer class ids.
    """
    if class_major:
        c, n = pred.shape
        pred_cn = pred                                    # producer already (C, N)
    else:
        n, c = pred.shape
        pred_cn = pred.T                                  # single layout fix-up pass

    labels2d = labels.reshape(1, n).astype(jnp.int32)     # (1, N), lane-dense

    # Lane-aligned tile on the sample axis, capped to keep the double-buffered
    # VMEM footprint (pred + labels) comfortably under 48 MiB on every gen.
    tile_n = max(128, (int(tile_n) // 128) * 128)
    tile_n = min(tile_n, 196608)
    tile_n = min(tile_n, pl.cdiv(n, 128) * 128)

    num_tiles = pl.cdiv(n, tile_n)
    num_cores = max(1, int(num_cores))
    tiles_per_core = pl.cdiv(num_tiles, num_cores)
    last_tile = num_tiles - 1

    def tile_index(core, i):
        # Clamp so the auto-DMA never targets a block entirely past N; the
        # kernel masks such duplicated tiles to a zero contribution.
        return jnp.minimum(core * tiles_per_core + i, last_tile)

    c_pad = ((c + 7) // 8) * 8                            # sublane padding of C
    per_buf = (c_pad * 4 + 8 * 4) * tile_n                # pred + labels, one buffer
    vmem_limit = int(min(max(2 * per_buf + (2 << 20), 32 * 1024 * 1024),
                         48 * 1024 * 1024))

    kernel = functools.partial(_mae_loss_kernel, n_valid=n, tile_n=tile_n,
                               tiles_per_core=tiles_per_core)

    out = pl.pallas_call(
        kernel,
        out_shape=jax.ShapeDtypeStruct((num_cores * 8, 128), jnp.float32),
        grid=(num_cores, tiles_per_core),
        in_specs=[
            pl.BlockSpec((c, tile_n), lambda core, i: (0, tile_index(core, i))),
            pl.BlockSpec((1, tile_n), lambda core, i: (0, tile_index(core, i))),
        ],
        out_specs=pl.BlockSpec((8, 128), lambda core, i: (core, 0)),
        compiler_params=pltpu.CompilerParams(
            dimension_semantics=("parallel", "arbitrary"),
            vmem_limit_bytes=vmem_limit,
        ),
    )(pred_cn, labels2d)

    # Each core's (8,128) block holds its partial sum broadcast to every element.
    total = jnp.sum(out[::8, 0])
    return (scale / n) * total


def _reference(pred, labels, *, scale=2.0):
    """Pure-JAX mirror of the PyTorch MAELoss module."""
    num_classes = pred.shape[1]
    p = jax.nn.softmax(pred.astype(jnp.float32), axis=1)
    one_hot = jax.nn.one_hot(labels, num_classes, dtype=jnp.float32)
    loss = 1.0 - jnp.sum(one_hot * p, axis=1)
    return scale * jnp.mean(loss)


if __name__ == "__main__":
    key = jax.random.PRNGKey(0)
    k1, k2, k3, k4 = jax.random.split(key, 4)

    # module defaults: num_classes=10, scale=2.0; small batch
    N, C = 8, 10
    pred = jax.random.normal(k1, (N, C), dtype=jnp.float32)
    labels = jax.random.randint(k2, (N,), 0, C, dtype=jnp.int32)

    loss = jax.block_until_ready(mae_loss(pred, labels, scale=2.0))
    ref = _reference(pred, labels, scale=2.0)
    assert jnp.allclose(loss, ref, rtol=1e-3, atol=1e-4), (loss, ref)

    # multi-tile accumulation, ragged (unpadded) last tile, and the clamped
    # duplicate tile on the second core (num_tiles=3 over a 2-core grid)
    N2 = 300
    pred2 = jax.random.normal(k3, (N2, C), dtype=jnp.float32)
    labels2 = jax.random.randint(k4, (N2,), 0, C, dtype=jnp.int32)
    loss2 = jax.block_until_ready(mae_loss(pred2, labels2, scale=2.0, tile_n=128))
    ref2 = _reference(pred2, labels2, scale=2.0)
    assert jnp.allclose(loss2, ref2, rtol=1e-3, atol=1e-4), (loss2, ref2)

    # producer-side (C, N) layout path: no wrapper transpose at all
    loss3 = jax.block_until_ready(
        mae_loss(pred2.T, labels2, scale=2.0, tile_n=128, class_major=True))
    assert jnp.allclose(loss3, ref2, rtol=1e-3, atol=1e-4), (loss3, ref2)

    print("KERNEL_OK")
</pallas_src>

<mosaic_0001>
module attributes {stable_mosaic.version = 11 : i64} {
  func.func @_mae_loss_kernel(%arg0: i32, %arg1: i32, %arg2: memref<10x128xf32, #tpu.memory_space<vmem>>, %arg3: memref<1x128xi32, #tpu.memory_space<vmem>>, %arg4: memref<8x128xf32, #tpu.memory_space<vmem>>) attributes {dimension_semantics = [#tpu.dimension_semantics<parallel>, #tpu.dimension_semantics<arbitrary>], iteration_bounds = array<i64: 2, 1>, scalar_prefetch = 0 : i64, scratch_operands = 0 : i64, tpu.core_type = #tpu.core_type<tc>, window_params = [{transform_indices = @transform_0, window_bounds = array<i64: 10, 128>}, {transform_indices = @transform_1, window_bounds = array<i64: 1, 128>}, {transform_indices = @transform_2, window_bounds = array<i64: 8, 128>}]} {
    %c0_i32 = arith.constant 0 : i32
    %0 = arith.cmpi eq, %arg1, %c0_i32 : i32
    %1 = arith.extui %0 : i1 to i32
    %c0_i32_0 = arith.constant 0 : i32
    %2 = arith.cmpi ne, %1, %c0_i32_0 : i32
    scf.if %2 {
      %cst_16 = arith.constant 0.000000e+00 : f32
      %46 = vector.broadcast %cst_16 : f32 to vector<8x128xf32>
      %c0_17 = arith.constant 0 : index
      %c0_18 = arith.constant 0 : index
      %47 = vector.load %arg4[%c0_17, %c0_18] : memref<8x128xf32, #tpu.memory_space<vmem>>, vector<8x128xf32>
      tpu.vector_store %arg4[%c0_17, %c0_18], %46 {strides = array<i32>} : memref<8x128xf32, #tpu.memory_space<vmem>>, vector<8x128xf32>,
    } else {
    }
    %c1_i32 = arith.constant 1 : i32
    %3 = arith.muli %arg0, %c1_i32 : i32
    %4 = arith.addi %3, %arg1 : i32
    %c128_i32 = arith.constant 128 : i32
    %5 = arith.muli %4, %c128_i32 : i32
    %c0 = arith.constant 0 : index
    %c0_1 = arith.constant 0 : index
    %6 = vector.load %arg2[%c0, %c0_1] : memref<10x128xf32, #tpu.memory_space<vmem>>, vector<10x128xf32>
    %c0_2 = arith.constant 0 : index
    %c0_3 = arith.constant 0 : index
    %7 = vector.load %arg3[%c0_2, %c0_3] : memref<1x128xi32, #tpu.memory_space<vmem>>, vector<1x128xi32>
    %8 = tpu.iota {dimensions = array<i32: 1>} : vector<1x128xi32>
    %9 = vector.broadcast %5 : i32 to vector<1x128xi32>
    %10 = arith.addi %8, %9 : vector<1x128xi32>
    %c8_i32 = arith.constant 8 : i32
    %11 = vector.broadcast %c8_i32 : i32 to vector<1x128xi32>
    %12 = arith.cmpi slt, %10, %11 : vector<1x128xi32>
    %cst = arith.constant dense<0xFF800000> : vector<128xf32>
    %13 = vector.multi_reduction <maximumf>, %6, %cst [0] : vector<10x128xf32> to vector<128xf32>
    %14 = vector.shape_cast %13 : vector<128xf32> to vector<1x128xf32>
    %15 = vector.broadcast %14 : vector<1x128xf32> to vector<10x128xf32>
    %16 = arith.subf %6, %15 : vector<10x128xf32>
    %17 = math.exp %16 : vector<10x128xf32>
    %cst_4 = arith.constant dense<0.000000e+00> : vector<128xf32>
    %18 = vector.multi_reduction <add>, %17, %cst_4 [0] : vector<10x128xf32> to vector<128xf32>
    %19 = vector.shape_cast %18 : vector<128xf32> to vector<1x128xf32>
    %cst_5 = arith.constant 1.000000e+00 : f32
    %20 = vector.broadcast %cst_5 : f32 to vector<1x128xf32>
    %21 = arith.select %12, %19, %20 : vector<1x128xi1>, vector<1x128xf32>
    %c-1_i32 = arith.constant -1 : i32
    %22 = vector.broadcast %c-1_i32 : i32 to vector<1x128xi32>
    %23 = arith.select %12, %7, %22 : vector<1x128xi1>, vector<1x128xi32>
    %24 = tpu.iota {dimensions = array<i32: 0>} : vector<10x128xi32>
    %25 = vector.broadcast %23 : vector<1x128xi32> to vector<10x128xi32>
    %26 = arith.cmpi eq, %24, %25 : vector<10x128xi32>
    %cst_6 = arith.constant 0.000000e+00 : f32
    %27 = vector.broadcast %cst_6 : f32 to vector<10x128xf32>
    %28 = arith.select %26, %17, %27 : vector<10x128xi1>, vector<10x128xf32>
    %cst_7 = arith.constant dense<0.000000e+00> : vector<128xf32>
    %29 = vector.multi_reduction <add>, %28, %cst_7 [0] : vector<10x128xf32> to vector<128xf32>
    %30 = vector.shape_cast %29 : vector<128xf32> to vector<1x128xf32>
    %31 = tpu.reciprocal %21 {approx = true} : vector<1x128xf32> -> vector<1x128xf32>
    %32 = arith.mulf %30, %31 : vector<1x128xf32>
    %c8_i32_8 = arith.constant 8 : i32
    %33 = arith.subi %c8_i32_8, %5 : i32
    %c0_i32_9 = arith.constant 0 : i32
    %c128_i32_10 = arith.constant 128 : i32
    %34 = arith.maxsi %c0_i32_9, %33 : i32
    %35 = arith.minsi %c128_i32_10, %34 : i32
    %36 = arith.sitofp %35 : i32 to f32
    %c0_11 = arith.constant 0 : index
    %c0_12 = arith.constant 0 : index
    %37 = vector.load %arg4[%c0_11, %c0_12] : memref<8x128xf32, #tpu.memory_space<vmem>>, vector<8x128xf32>
    %38 = vector.shape_cast %32 : vector<1x128xf32> to vector<1x1x128xf32>
    %cst_13 = arith.constant dense<0.000000e+00> : vector<1xf32>
    %39 = vector.multi_reduction <add>, %38, %cst_13 [1, 2] : vector<1x1x128xf32> to vector<1xf32>
    %40 = vector.shape_cast %39 : vector<1xf32> to vector<1x1x1xf32>
    %41 = vector.extract %40[0, 0, 0] : f32 from vector<1x1x1xf32>
    %42 = arith.subf %36, %41 : f32
    %43 = vector.broadcast %42 : f32 to vector<8x128xf32>
    %44 = arith.addf %37, %43 : vector<8x128xf32>
    %c0_14 = arith.constant 0 : index
    %c0_15 = arith.constant 0 : index
    %45 = vector.load %arg4[%c0_14, %c0_15] : memref<8x128xf32, #tpu.memory_space<vmem>>, vector<8x128xf32>
    tpu.vector_store %arg4[%c0_14, %c0_15], %44 {strides = array<i32>} : memref<8x128xf32, #tpu.memory_space<vmem>>, vector<8x128xf32>,
    return
  }
  func.func @transform_0(%arg0: i32, %arg1: i32) -> (i32, i32) {
    %c1_i32 = arith.constant 1 : i32
    %0 = arith.muli %arg0, %c1_i32 : i32
    %1 = arith.addi %0, %arg1 : i32
    %c0_i32 = arith.constant 0 : i32
    %2 = arith.minsi %1, %c0_i32 : i32
    %c0_i32_0 = arith.constant 0 : i32
    %c0_i32_1 = arith.constant 0 : i32
    return %c0_i32_0, %2 : i32, i32
  }
  func.func @transform_1(%arg0: i32, %arg1: i32) -> (i32, i32) {
    %c1_i32 = arith.constant 1 : i32
    %0 = arith.muli %arg0, %c1_i32 : i32
    %1 = arith.addi %0, %arg1 : i32
    %c0_i32 = arith.constant 0 : i32
    %2 = arith.minsi %1, %c0_i32 : i32
    %c0_i32_0 = arith.constant 0 : i32
    %c0_i32_1 = arith.constant 0 : i32
    return %c0_i32_0, %2 : i32, i32
  }
  func.func @transform_2(%arg0: i32, %arg1: i32) -> (i32, i32) {
    %c0_i32 = arith.constant 0 : i32
    %c0_i32_0 = arith.constant 0 : i32
    return %arg0, %c0_i32 : i32, i32
  }
}

</mosaic_0001>

<llo_original>
// kernel: tpu_custom_call.1
$region0: #{tpu_custom_call.1}
  #allocation0 [shape = 'u32[]', space=smem, size = 0x4, offset = 0x4, fixed_abs, tag = 'smem constant byte address 0x4 - core index']
  #allocation1 [shape = 'u32[72,128]{1,0:T(1,128)}', space=vmem, size = 0x9000, scoped, tag = 'internal scratch']
  %s0 = inlined_call_operand.vmem [shape: f32[10,8], index: 0, kind: input, shape index: {}]
  %s1 = inlined_call_operand.vmem [shape: s32[1,8], index: 1, kind: input, shape index: {}]
  %s2 = inlined_call_operand.hbm [shape: f32[16,128], index: 2, kind: output, shape index: {}]
  %s3 = sld [smem:[#allocation0]]
  $region45: #{tpu_custom_call.1} parent=0
    _
  %s5 = ssub.s32 1, %s3
  %s6 = scalar_select 0, %s5, %s3
  $region1: #{tpu_custom_call.1} parent=0
    #allocation2 [shape = 'u8[8192]{0}', space=vmem, size = 0x2000, scoped, tag = 'output window, operand 0']
    #allocation3 [shape = 's32[2]{0}', space=sflag, size = 0x8, scoped, tag = 'scoped memory for tpu_custom_call.1']
    %7 = vsyncpa [#allocation3], 0
    %s8 = scalar_lea.sflag [#allocation3], 1
    %9 = vsyncpa %s8, 0
    loop: start=0, step=1, limit=4
    $region2: #{tpu_custom_call.1} parent=1 // loop_pre_header
      _
    $region3: #{tpu_custom_call.1} parent=1 // loop_header
      %s11 = sphi 0, %s15
      %p12 = scmp.ge.s32.totalorder %s11, 4
      %s18 = sphi 0, %s30
      %s19 = sphi 0, %s26
      %s20 = sphi 0, %s18
      %s21 = sphi 0, %s19
      %s22 = sphi 0, %s20
      %s23 = sphi 0, %s21
      %s39 = sphi 0, %s41
      %s42 = sphi 0, %s39
      %s43 = sphi 0, %s42
      %s59 = sphi 0, %s43
      %s71 = sphi 0, %s73
      %s74 = sphi 0, %s71
      %s75 = sphi 0, %s74
      %s91 = sphi 0, %s75
      %s97 = sphi 0, %s99
      %s100 = sphi 0, %s97
      %s101 = sphi 0, %s100
      %s117 = sphi 0, %s101
    $region4: #{tpu_custom_call.1} parent=1 // loop_header_branch
      %14 = sbr.rel (%p12) target = $region8
    $region5: #{tpu_custom_call.1} parent=1 // loop_body
      %s16 = ssub.s32 %s11, 1
      %s17 = ssub.s32 %s11, 2
      %s24 = sadd.s32 1, %s19
      %p25 = scmp.ge.s32.totalorder %s24, 1
      %s26 = scalar_select %p25, 0, %s24
      %s27 = sadd.s32 1, %s18
      %s28 = scalar_select %p25, %s27, %s18
      %p29 = scmp.ge.s32.totalorder %s28, 2
      %s30 = scalar_select %p29, 0, %s28
      %s31 = sadd.s32 %s18, %s19
      %p32 = scmp.lt.s32.totalorder %s31, 0
      %s33 = scalar_select %p32, %s31, 0
      %s34 = sadd.s32 %s30, %s26
      %p35 = scmp.lt.s32.totalorder %s34, 0
      %s36 = scalar_select %p35, %s34, 0
      %s37 = ssub.s32 %s33, %s36
      %p38 = scmp.eq.s32.totalorder %s37, 0
      %s40 = sadd.s32 %s39, 1
      %s41 = scalar_select %p38, %s39, %s40
      %p44 = pneg %p38
      %p45 = scmp.eq.s32.totalorder %s11, 1
      %p46 = por %p44, %p45
      %p47 = scmp.ne.s32.totalorder %s39, %s42
      %p48 = scmp.eq.s32.totalorder %s11, 0
      %p49 = por %p47, %p48
      %p50 = scmp.ne.s32.totalorder %s39, %s42
      %p51 = scmp.eq.s32.totalorder %s16, 1
      %p52 = por %p50, %p51
      %p53 = scmp.ne.s32.totalorder %s42, %s43
      %p54 = scmp.eq.s32.totalorder %s16, 0
      %p55 = por %p53, %p54
      %p56 = scmp.ne.s32.totalorder %s42, %s43
      %p57 = scmp.eq.s32.totalorder %s17, 1
      %p58 = por %p56, %p57
      %p60 = scmp.ne.s32.totalorder %s43, %s59
      %p61 = scmp.eq.s32.totalorder %s17, 0
      %p62 = por %p60, %p61
      %s63 = sadd.s32 %s18, %s19
      %p64 = scmp.lt.s32.totalorder %s63, 0
      %s65 = scalar_select %p64, %s63, 0
      %s66 = sadd.s32 %s30, %s26
      %p67 = scmp.lt.s32.totalorder %s66, 0
      %s68 = scalar_select %p67, %s66, 0
      %s69 = ssub.s32 %s65, %s68
      %p70 = scmp.eq.s32.totalorder %s69, 0
      %s72 = sadd.s32 %s71, 1
      %s73 = scalar_select %p70, %s71, %s72
      %p76 = pneg %p70
      %p77 = scmp.eq.s32.totalorder %s11, 1
      %p78 = por %p76, %p77
      %p79 = scmp.ne.s32.totalorder %s71, %s74
      %p80 = scmp.eq.s32.totalorder %s11, 0
      %p81 = por %p79, %p80
      %p82 = scmp.ne.s32.totalorder %s71, %s74
      %p83 = scmp.eq.s32.totalorder %s16, 1
      %p84 = por %p82, %p83
      %p85 = scmp.ne.s32.totalorder %s74, %s75
      %p86 = scmp.eq.s32.totalorder %s16, 0
      %p87 = por %p85, %p86
      %p88 = scmp.ne.s32.totalorder %s74, %s75
      %p89 = scmp.eq.s32.totalorder %s17, 1
      %p90 = por %p88, %p89
      %p92 = scmp.ne.s32.totalorder %s75, %s91
      %p93 = scmp.eq.s32.totalorder %s17, 0
      %p94 = por %p92, %p93
      %s95 = ssub.s32 %s18, %s30
      %p96 = scmp.eq.s32.totalorder %s95, 0
      %s98 = sadd.s32 %s97, 1
      %s99 = scalar_select %p96, %s97, %s98
      %p102 = pneg %p96
      %p103 = scmp.eq.s32.totalorder %s11, 1
      %p104 = por %p102, %p103
      %p105 = scmp.ne.s32.totalorder %s97, %s100
      %p106 = scmp.eq.s32.totalorder %s11, 0
      %p107 = por %p105, %p106
      %p108 = scmp.ne.s32.totalorder %s97, %s100
      %p109 = scmp.eq.s32.totalorder %s16, 1
      %p110 = por %p108, %p109
      %p111 = scmp.ne.s32.totalorder %s100, %s101
      %p112 = scmp.eq.s32.totalorder %s16, 0
      %p113 = por %p111, %p112
      %p114 = scmp.ne.s32.totalorder %s100, %s101
      %p115 = scmp.eq.s32.totalorder %s17, 1
      %p116 = por %p114, %p115
      %p118 = scmp.ne.s32.totalorder %s101, %s117
      %p119 = scmp.eq.s32.totalorder %s17, 0
      %p120 = por %p118, %p119
      %p121 = scmp.le.s32.totalorder 1, %s11
      %p122 = scmp.lt.s32.totalorder %s11, 3
      %p123 = pnand %p121, %p122
      %p124 = pneg %p123
      // Predicated region
      $region9: #{tpu_custom_call.1} parent=5 // pred_check
        _
      $region10: #{tpu_custom_call.1} parent=5 // pred_check_branch
        %126 = sbr.rel (%p123) target = $region12
      $region11: #{tpu_custom_call.1} parent=5 // pred_region
        %s127 = ssub.s32 %s11, 1
      $region12: #{tpu_custom_call.1} parent=5 // pred_fallthru
        _
      %p128 = scmp.lt.s32.totalorder %s11, 2
      // Predicated region
      $region13: #{tpu_custom_call.1} parent=5 // pred_check
        %p129 = pneg %p128
      $region14: #{tpu_custom_call.1} parent=5 // pred_check_branch
        %131 = sbr.rel (%p129) target = $region16
      $region15: #{tpu_custom_call.1} parent=5 // pred_region
        // Predicated region
        $region17: #{tpu_custom_call.1} parent=15 // pred_check
          %p132 = pneg %p49
        $region18: #{tpu_custom_call.1} parent=15 // pred_check_branch
          %134 = sbr.rel (%p132) target = $region20
        $region19: #{tpu_custom_call.1} parent=15 // pred_region
          %s135 = sadd.s32 %s18, %s19
          %p136 = scmp.lt.s32.totalorder %s135, 0
          %s137 = scalar_select %p136, %s135, 0
          %p138 = scmp.lt.s32.totalorder %s137, 0
          %s139 = scalar_select %p138, %s137, 0
          %s140 = smul.addr %s139, 8
          %s141 = scalar_lea.vmem %s0, %s140
          %s142 = sadd.s32 %s18, %s19
          %p143 = scmp.lt.s32.totalorder %s142, 0
          %s144 = scalar_select %p143, %s142, 0
        $region20: #{tpu_custom_call.1} parent=15 // pred_fallthru
          _
        // Predicated region
        $region21: #{tpu_custom_call.1} parent=15 // pred_check
          %p145 = pneg %p81
        $region22: #{tpu_custom_call.1} parent=15 // pred_check_branch
          %147 = sbr.rel (%p145) target = $region24
        $region23: #{tpu_custom_call.1} parent=15 // pred_region
          %s148 = sadd.s32 %s18, %s19
          %p149 = scmp.lt.s32.totalorder %s148, 0
          %s150 = scalar_select %p149, %s148, 0
          %p151 = scmp.lt.s32.totalorder %s150, 0
          %s152 = scalar_select %p151, %s150, 0
          %s153 = scalar_lea.vmem %s1, %s152
          %s154 = sadd.s32 %s18, %s19
          %p155 = scmp.lt.s32.totalorder %s154, 0
          %s156 = scalar_select %p155, %s154, 0
        $region24: #{tpu_custom_call.1} parent=15 // pred_fallthru
          _
      $region16: #{tpu_custom_call.1} parent=5 // pred_fallthru
        _
      %p157 = scmp.le.s32.totalorder 1, %s11
      %p158 = scmp.lt.s32.totalorder %s11, 3
      %p159 = pnand %p157, %p158
      %p160 = pneg %p159
      // Predicated region
      $region25: #{tpu_custom_call.1} parent=5 // pred_check
        _
      $region26: #{tpu_custom_call.1} parent=5 // pred_check_branch
        %162 = sbr.rel (%p159) target = $region28
      $region27: #{tpu_custom_call.1} parent=5 // pred_region
        %s163 = ssub.s32 %s11, 1
        %s164 = sadd.s32 %s20, %s21
        %p165 = scmp.lt.s32.totalorder %s164, 0
        %s166 = scalar_select %p165, %s164, 0
        %p167 = scmp.lt.s32.totalorder %s166, 0
        %s168 = scalar_select %p167, %s166, 0
        %s169 = smul.addr %s168, 8
        %s170 = scalar_lea.vmem %s0, %s169
        %p171 = pneg %p55
        %p172 = pneg %p52
        %s173 = sadd.s32 %s20, %s21
        %p174 = scmp.lt.s32.totalorder %s173, 0
        %s175 = scalar_select %p174, %s173, 0
        %p176 = scmp.lt.s32.totalorder %s175, 0
        %s177 = scalar_select %p176, %s175, 0
        %s178 = scalar_lea.vmem %s1, %s177
        %p179 = pneg %p87
        %p180 = pneg %p84
        %p181 = pneg %p113
        %p182 = pneg %p110
        %s183 = sand.u32 %s100, 1
        %s184 = scalar_lea.sflag [#allocation3], %s183
        %s185 = sand.u32 %s100, 1
        %s186 = smul.addr %s185, 8
        %s187 = scalar_lea.vmem [#allocation2], %s186
        %s188 = sadd.s32 %s20, %s21
        %p189 = scmp.lt.s32.totalorder %s188, 0
        %s190 = scalar_select %p189, %s188, 0
        %p191 = scmp.lt.s32.totalorder %s190, 0
        %s192 = scalar_select %p191, %s190, 0
        %s193 = smul.addr %s192, 8
        %s194 = scalar_lea.vmem %s0, %s193
        %s195 = sadd.s32 %s20, %s21
        %p196 = scmp.lt.s32.totalorder %s195, 0
        %s197 = scalar_select %p196, %s195, 0
        %s198 = sadd.s32 %s20, %s21
        %p199 = scmp.lt.s32.totalorder %s198, 0
        %s200 = scalar_select %p199, %s198, 0
        %p201 = scmp.lt.s32.totalorder %s200, 0
        %s202 = scalar_select %p201, %s200, 0
        %s203 = scalar_lea.vmem %s1, %s202
        %s204 = sadd.s32 %s20, %s21
        %p205 = scmp.lt.s32.totalorder %s204, 0
        %s206 = scalar_select %p205, %s204, 0
        %p207 = scmp.eq.s32.totalorder %s21, 0
        // Predicated region
        $region29: #{tpu_custom_call.1} parent=27 // pred_check
          %p208 = pneg %p207
        $region30: #{tpu_custom_call.1} parent=27 // pred_check_branch
          %210 = sbr.rel (%p208) target = $region32
        $region31: #{tpu_custom_call.1} parent=27 // pred_region
          %211 = vst [vmem:[%s187] sm:$0xff] 0.0
        $region32: #{tpu_custom_call.1} parent=27 // pred_fallthru
          _
        %s212 = sadd.s32 %s20, %s21
        %s213 = smul.u32 %s212, 128
        %v214 = vld [vmem:[%s194] sm:$0xff]
        %v215 = vld [vmem:[%s194 + $0x8] sm:$0x3]
        %v216 = vld [vmem:[%s203] sm:$0x1]
        %v217 = vlaneseq
        %v218 = vand.u32 %v217, 127
        %v219 = vstv %s213
        %v220 = vadd.s32 %v218, %v219
        %vm221 = vcmp.lt.s32.totalorder %v220, 8
        %vm222 = vcmask 1041408
        %v223 = vsel %vm222, %v215, -inf
        %v224 = vmax.f32 %v214, %v223
        %v225 = vrot.slane %v224, 4
        %v226 = vmax.f32 %v224, %v225
        %v227 = vrot.slane %v226, 2
        %v228 = vmax.f32 %v226, %v227
        %v229 = vrot.slane %v228, 1
        %v230 = vmax.f32 %v228, %v229
        %v231 = vsub.f32 %v214, %v230
        %v232 = vsub.f32 %v215, %v230
        %v233 = vmul.f32 %v231, 1.442695
        %v234 = vpow.pop %v233
        %v235 = vmul.f32 %v232, 1.442695
        %v236 = vpow.pop %v235
        %v237 = vsel %vm222, %v236, 0.0
        %v238 = vadd.f32 %v234, %v237
        %v239 = vrot.slane %v238, 4
        %v240 = vadd.f32 %v238, %v239
        %v241 = vrot.slane %v240, 2
        %v242 = vadd.f32 %v240, %v241
        %v243 = vrot.slane %v242, 1
        %v244 = vadd.f32 %v242, %v243
        %v245 = vsel %vm221, %v244, 1.0
        %v246 = vsel %vm221, %v216, 4294967295
        %v247 = vlaneseq
        %v248 = vshrl.u32 %v247, 7
        %v249 = vadd.s32 %v248, 8
        %v250 = vperm.slane %v246, 0
        %vm251 = vcmp.eq.s32.totalorder %v248, %v250
        %vm252 = vcmp.eq.s32.totalorder %v249, %v250
        %v253 = vsel %vm251, %v234, 0.0
        %v254 = vsel %vm252, %v236, 0.0
        %v255 = vsel %vm222, %v254, 0.0
        %v256 = vadd.f32 %v253, %v255
        %v257 = vrot.slane %v256, 4
        %v258 = vadd.f32 %v256, %v257
        %v259 = vrot.slane %v258, 2
        %v260 = vadd.f32 %v258, %v259
        %v261 = vrot.slane %v260, 1
        %v262 = vadd.f32 %v260, %v261
        %v263 = vrcp.pop %v245
        %v264 = vmul.f32 %v262, %v263
        %s265 = ssub.s32 8, %s213
        %p266 = scmp.gt.s32.totalorder %s265, 0
        %s267 = scalar_select %p266, %s265, 0
        %p268 = scmp.lt.s32.totalorder %s267, 128
        %s269 = scalar_select %p268, %s267, 128
        %s270 = scvt.s32.f32 %s269
        %v271 = vld [vmem:[%s187] sm:$0xff]
        %vm272 = vcmask 1040384
        %v273 = vsel %vm272, %v264, 0.0
        %274 = vadd.xlane.f32.xlu0 %v273
        %v275 = vpop.xlane.xlu0 %274
        %v276 = vrot.slane %v275, 4
        %v277 = vadd.f32 %v275, %v276
        %v278 = vrot.slane %v277, 2
        %v279 = vadd.f32 %v277, %v278
        %v280 = vrot.slane %v279, 1
        %v281 = vadd.f32 %v279, %v280
        %s282 = vtos %v281
        %s283 = ssub.f32 %s270, %s282
        %v284 = vstv %s283
        %v285 = vadd.f32 %v271, %v284
        %286 = vst [vmem:[%s187] sm:$0xff] %v285
        %s287 = sand.u32 %s100, 1
        %s288 = scalar_lea.sflag [#allocation3], %s287
        %s289 = sand.u32 %s100, 1
        %s290 = smul.addr %s289, 8
        %s291 = scalar_lea.vmem [#allocation2], %s290
        // Predicated region
        $region33: #{tpu_custom_call.1} parent=27 // pred_check
          %p292 = pneg %p110
        $region34: #{tpu_custom_call.1} parent=27 // pred_check_branch
          %294 = sbr.rel (%p292) target = $region36
        $region35: #{tpu_custom_call.1} parent=27 // pred_region
          %296 = vsyncadd %s288, 0
          %s297 = smul.addr %s20, 8
          %s298 = scalar_lea.hbm %s2, %s297
          %s300 = sshll.u32 %s291, 4
          %s301 = int_to_ptr.vmem [resolvable:$true] %s300
          %s302 = sshll.u32 %s298, 4
          %s303 = int_to_ptr.hbm [resolvable:$true] %s302
          %305 = dma.vmem_to_hbm [thread:$0]  %s301, 128, %s303, %s288
        $region36: #{tpu_custom_call.1} parent=27 // pred_fallthru
          _
      $region28: #{tpu_custom_call.1} parent=5 // pred_fallthru
        _
      %p306 = scmp.le.s32.totalorder 2, %s11
      // Predicated region
      $region37: #{tpu_custom_call.1} parent=5 // pred_check
        %p307 = pneg %p306
      $region38: #{tpu_custom_call.1} parent=5 // pred_check_branch
        %309 = sbr.rel (%p307) target = $region40
      $region39: #{tpu_custom_call.1} parent=5 // pred_region
        %s310 = ssub.s32 %s11, 2
        // Predicated region
        $region41: #{tpu_custom_call.1} parent=39 // pred_check
          %p311 = pneg %p116
        $region42: #{tpu_custom_call.1} parent=39 // pred_check_branch
          %313 = sbr.rel (%p311) target = $region44
        $region43: #{tpu_custom_call.1} parent=39 // pred_region
          %s314 = sand.u32 %s101, 1
          %s315 = scalar_lea.sflag [#allocation3], %s314
          %s316 = sand.u32 %s101, 1
          %s317 = smul.addr %s316, 8
          %s318 = scalar_lea.vmem [#allocation2], %s317
          %320 = dma.done %s315, 128
        $region44: #{tpu_custom_call.1} parent=39 // pred_fallthru
          _
      $region40: #{tpu_custom_call.1} parent=5 // pred_fallthru
        _
    $region6: #{tpu_custom_call.1} parent=1 // loop_footer
      %s15 = sadd.s32 1, %s11
    $region7: #{tpu_custom_call.1} parent=1 // loop_footer_branch
      %10 = sbr.rel target = $region3
    $region8: #{tpu_custom_call.1} parent=1 // loop_exit
      _
    %321 = vsyncpa [#allocation3], 1
    %s322 = scalar_lea.sflag [#allocation3], 1
    %323 = vsyncpa %s322, 1

</llo_original>
